<compile_context>
chip_gen: v7x
topology: tpu7x:2x2x1
jax: 0.10.0
libtpu: 0.0.40
codegen_flags: <defaults>
</compile_context>

<pallas_src>
import functools

import jax
import jax.numpy as jnp
import numpy as np
from jax.experimental import pallas as pl
from jax.experimental.pallas import tpu as pltpu

MATMUL_DTYPE = jnp.bfloat16   # MXU operand dtype (full rate on v5e/v6e/v7x); accum stays f32.
XPROJ_DTYPE = jnp.float32     # hoisted-projection output dtype; set to bf16 on v7x to halve
                              # the recurrence's dominant VMEM buffer (gate add still f32).
_LANE = 128


def _round_up(x, m):
    return ((x + m - 1) // m) * m


def _vmem_limit(resident_bytes):
    # Never below any generation's default scoped limit (16/32 MiB); cap at 128 MiB.
    return int(min(128 << 20, max(32 << 20, int(resident_bytes * 1.25) + (2 << 20))))


# ----------------------------- Row-tiled fused projection GEMM -----------------------------
def _proj_kernel(x_ref, w_ref, b_ref, o_ref):
    """o[d] = sum_s x[s] @ w[d, s] + b[d] for every output block d, on one row tile."""
    S = x_ref.shape[0]
    D = o_ref.shape[0]
    xs = [x_ref[s].astype(w_ref.dtype) for s in range(S)]   # cast once, reused by both dirs
    for d in range(D):
        acc = jnp.dot(xs[0], w_ref[d, 0], preferred_element_type=jnp.float32)
        for s in range(1, S):
            acc = acc + jnp.dot(xs[s], w_ref[d, s], preferred_element_type=jnp.float32)
        o_ref[d] = (acc + b_ref[d]).astype(o_ref.dtype)


def _dual_projection(x_slabs, w_pack, b_pack, *, block_rows=512, out_dtype=jnp.float32):
    """Row-tiled fused GEMM.

    x_slabs: (S, N, K)     activation slabs sharing the row dim (S=2 folds a feature concat)
    w_pack:  (D, S, K, M)  per-output-block weights (D=2 -> one block per LSTM direction)
    b_pack:  (D, 1, M) f32
    returns  (D, N, M) in out_dtype.
    """
    S, N, K = x_slabs.shape
    D, _, _, M = w_pack.shape
    # Per-generation tuning: 512 rows fit v7x's 64 MiB VMEM comfortably; sweep 1024-2048 on
    # v5e/v6e (128 MiB VMEM) for a few extra % of HBM roofline.
    bm = N if N <= block_rows else block_rows
    x_isz = jnp.dtype(x_slabs.dtype).itemsize
    o_isz = jnp.dtype(out_dtype).itemsize
    resident = (2 * (S * bm * K * x_isz + D * bm * M * o_isz)       # double-buffered tiles
                + 2 * (w_pack.nbytes + b_pack.nbytes))              # resident (2x-buffered) weights
    # TODO(synk): single-buffer the constant-index weight/bias blocks (pipeline_mode=
    # pl.Buffered(1)) to halve their resident footprint on v7x's 64 MiB VMEM.
    return pl.pallas_call(
        _proj_kernel,
        out_shape=jax.ShapeDtypeStruct((D, N, M), out_dtype),
        grid=(pl.cdiv(N, bm),),
        in_specs=[pl.BlockSpec((S, bm, K), lambda i: (0, i, 0)),
                  pl.BlockSpec(w_pack.shape, lambda i: (0, 0, 0, 0)),
                  pl.BlockSpec(b_pack.shape, lambda i: (0, 0, 0))],
        out_specs=pl.BlockSpec((D, bm, M), lambda i: (0, i, 0)),
        compiler_params=pltpu.CompilerParams(
            dimension_semantics=("parallel",),
            vmem_limit_bytes=_vmem_limit(resident)),
    )(x_slabs, w_pack, b_pack)


# ----------------------------- Bidirectional LSTM recurrence -----------------------------
def _bilstm_dir_kernel(xproj_ref, whh_ref, out_ref, *, T, Hp):
    """One LSTM direction (selected by the grid) over the full sequence.

    xproj_ref: (T, B, 4*Hp)  precomputed x @ W_ih^T + (b_ih + b_hh), gate-padded, lane-aligned
    whh_ref:   (Hp, 4*Hp)    recurrent weights (transposed, gate-padded)
    out_ref:   (T, B, Hp)    per-timestep hidden states
    """
    d = pl.program_id(0)                     # 0 = forward, 1 = backward (time-reversed)
    B = out_ref.shape[1]
    h0 = jnp.zeros((B, Hp), jnp.float32)
    c0 = jnp.zeros((B, Hp), jnp.float32)

    def step(t, carry):
        h, c = carry                         # state lives in vreg carries, not VMEM scratch
        t_eff = jnp.where(d == 0, t, T - 1 - t)
        # Only the small h @ W_hh matmul is serial; the input projection was hoisted.
        gates = xproj_ref[t_eff].astype(jnp.float32) + jnp.dot(
            h.astype(whh_ref.dtype), whh_ref[...], preferred_element_type=jnp.float32)
        # Gate columns are padded to 128-lane multiples, so these slices are lane-aligned.
        i = jax.nn.sigmoid(gates[:, 0 * Hp:1 * Hp])
        f = jax.nn.sigmoid(gates[:, 1 * Hp:2 * Hp])
        g = jnp.tanh(gates[:, 2 * Hp:3 * Hp])
        o = jax.nn.sigmoid(gates[:, 3 * Hp:4 * Hp])
        c_new = f * c + i * g
        h_new = o * jnp.tanh(c_new)
        out_ref[t_eff] = h_new.astype(out_ref.dtype)
        return h_new, c_new

    # Full unroll for short sequences; partial unroll otherwise (LLO scheduler visibility).
    jax.lax.fori_loop(0, T, step, (h0, c0), unroll=(True if T <= 16 else 4))


def bilstm_recurrence(xproj, whh_both, *, out_dtype=MATMUL_DTYPE):
    """xproj: (2, T, B, 4*Hp) direction-major; whh_both: (2, Hp, 4*Hp) -> (2, T, B, Hp)."""
    _, T, B, G = xproj.shape
    Hp = whh_both.shape[1]
    o_isz = jnp.dtype(out_dtype).itemsize
    resident = xproj.nbytes + whh_both.nbytes + 2 * T * B * Hp * o_isz + 4 * B * G
    # TODO(synk): for very large T*B (esp. v7x's 64 MiB VMEM) tile the time axis and
    # double-buffer xproj slabs with pltpu.make_async_copy instead of holding a whole
    # direction slab resident.
    kernel = functools.partial(_bilstm_dir_kernel, T=T, Hp=Hp)
    return pl.pallas_call(
        kernel,
        out_shape=jax.ShapeDtypeStruct((2, T, B, Hp), out_dtype),
        grid=(2,),   # direction axis: independent programs -> both TensorCores on v7x
        in_specs=[pl.BlockSpec((None, T, B, G), lambda dd: (dd, 0, 0, 0)),
                  pl.BlockSpec((None, Hp, G), lambda dd: (dd, 0, 0))],
        out_specs=pl.BlockSpec((None, T, B, Hp), lambda dd: (dd, 0, 0, 0)),
        compiler_params=pltpu.CompilerParams(
            dimension_semantics=("parallel",),
            vmem_limit_bytes=_vmem_limit(resident)),
    )(xproj, whh_both)


# ----------------------------- Parameter packing -----------------------------
def _pad_gate_cols(w_t, H, Hp):
    """(rows, 4H) -> (rows, 4Hp): gate g's H columns land at [g*Hp, g*Hp+H); rest zero."""
    if Hp == H:
        return w_t
    rows = w_t.shape[0]
    out = jnp.zeros((rows, 4 * Hp), w_t.dtype)
    for g in range(4):
        out = out.at[:, g * Hp:g * Hp + H].set(w_t[:, g * H:(g + 1) * H])
    return out


def _pad_rows(w, rows_p):
    if w.shape[0] == rows_p:
        return w
    pad = jnp.zeros((rows_p - w.shape[0],) + w.shape[1:], w.dtype)
    return jnp.concatenate([w, pad], axis=0)


def pack_params(params, H, Hp, matmul_dtype=MATMUL_DTYPE):
    """Transpose / gate-pad / slab-split the PyTorch-layout LSTM + Linear parameters.

    Padded gate columns and padded hidden rows are zero, so padded hidden units stay exactly
    zero through the recurrence and contribute nothing downstream (no masking needed).
    """
    def one_dir(p, split_input):
        w_ih, w_hh, b_ih, b_hh = p
        wih_t = _pad_gate_cols(w_ih.T, H, Hp)                          # (in_dim, 4Hp)
        if split_input:                                                # in_dim == 2H
            wih = jnp.stack([_pad_rows(wih_t[:H], Hp),
                             _pad_rows(wih_t[H:], Hp)])                # (2, Hp, 4Hp)
        else:
            wih = wih_t[None]                                          # (1, nIn, 4Hp)
        whh = _pad_rows(_pad_gate_cols(w_hh.T, H, Hp), Hp)             # (Hp, 4Hp)
        bias = _pad_gate_cols((b_ih + b_hh).reshape(1, -1), H, Hp)     # (1, 4Hp)
        return wih, whh, bias

    packed = {}
    for layer, split in (("0", False), ("1", True)):
        wih_f, whh_f, b_f = one_dir(params[f"l{layer}"], split)
        wih_b, whh_b, b_b = one_dir(params[f"l{layer}_rev"], split)
        packed[f"wih{layer}"] = jnp.stack([wih_f, wih_b]).astype(matmul_dtype)  # (2,S,K,4Hp)
        packed[f"whh{layer}"] = jnp.stack([whh_f, whh_b]).astype(matmul_dtype)  # (2,Hp,4Hp)
        packed[f"b{layer}"] = jnp.stack([b_f, b_b]).astype(jnp.float32)         # (2,1,4Hp)

    w_emb_t = params["emb_w"].T                                                 # (2H, nOut)
    w_emb = jnp.stack([_pad_rows(w_emb_t[:H], Hp), _pad_rows(w_emb_t[H:], Hp)]) # (2,Hp,nOut)
    packed["w_emb"] = w_emb[None].astype(matmul_dtype)                          # (1,2,Hp,nOut)
    packed["b_emb"] = params["emb_b"].reshape(1, 1, -1).astype(jnp.float32)
    return packed


# ----------------------------- Full forward -----------------------------
def bidirectional_lstm_forward(x, params, *, matmul_dtype=MATMUL_DTYPE, block_rows=512):
    T, B, nIn = x.shape
    H = params["l0"][1].shape[1]              # weight_hh: (4H, H)
    Hp = _round_up(H, _LANE)                  # lane-aligned per-gate hidden width
    p = pack_params(params, H, Hp, matmul_dtype)

    def lstm_layer(x_slabs, wih, bias, whh):
        # Hoisted, direction-fused input projection over all T*B rows (one big GEMM),
        # then the direction-parallel recurrence on the precomputed gate inputs.
        xproj = _dual_projection(x_slabs, wih, bias, block_rows=block_rows,
                                 out_dtype=XPROJ_DTYPE)               # (2, T*B, 4Hp)
        hfb = bilstm_recurrence(xproj.reshape(2, T, B, 4 * Hp), whh,
                                out_dtype=matmul_dtype)               # (2, T, B, Hp)
        return hfb.reshape(2, T * B, Hp)

    hfb = lstm_layer(x.reshape(1, T * B, nIn), p["wih0"], p["b0"], p["whh0"])
    # TODO(synk): nn.LSTM inter-layer dropout=0.5 is train-only; inference forward is identity.
    hfb = lstm_layer(hfb, p["wih1"], p["b1"], p["whh1"])

    # Embedding Linear: concat(hf, hb) folded into the GEMM via the two input slabs.
    out = _dual_projection(hfb, p["w_emb"], p["b_emb"], block_rows=block_rows,
                           out_dtype=jnp.float32)                     # (1, T*B, nOut)
    return out.reshape(T, B, -1)


# ----------------------------- Parameters (deterministic init) -----------------------------
def init_params(key, nIn, nHidden, nOut):
    H = nHidden
    k_lstm = 1.0 / np.sqrt(H)
    k_lin = 1.0 / np.sqrt(2 * H)
    keys = iter(jax.random.split(key, 32))

    def u(shape, k):
        return jax.random.uniform(next(keys), shape, jnp.float32, -k, k)

    params = {}
    for in_dim, (nf, nb) in zip([nIn, 2 * H], [("l0", "l0_rev"), ("l1", "l1_rev")]):
        for name in (nf, nb):
            params[name] = (
                u((4 * H, in_dim), k_lstm),   # weight_ih
                u((4 * H, H), k_lstm),        # weight_hh
                u((4 * H,), k_lstm),          # bias_ih
                u((4 * H,), k_lstm),          # bias_hh
            )
    params["emb_w"] = u((nOut, 2 * H), k_lin)
    params["emb_b"] = u((nOut,), k_lin)
    return params


# ----------------------------- Pure-JAX reference (f32) -----------------------------
def _ref_lstm_dir(x, w_ih, w_hh, b_ih, b_hh, reverse):
    T, B, _ = x.shape
    H = w_hh.shape[1]
    xs = x[::-1] if reverse else x

    def step(carry, x_t):
        h, c = carry
        gates = x_t @ w_ih.T + h @ w_hh.T + b_ih + b_hh
        i, f, g, o = jnp.split(gates, 4, axis=-1)
        c = jax.nn.sigmoid(f) * c + jax.nn.sigmoid(i) * jnp.tanh(g)
        h = jax.nn.sigmoid(o) * jnp.tanh(c)
        return (h, c), h

    init = (jnp.zeros((B, H), jnp.float32), jnp.zeros((B, H), jnp.float32))
    _, ys = jax.lax.scan(step, init, xs)
    return ys[::-1] if reverse else ys


def reference_forward(x, params):
    h = x
    for nf, nb in [("l0", "l0_rev"), ("l1", "l1_rev")]:
        f = _ref_lstm_dir(h, *params[nf], reverse=False)
        b = _ref_lstm_dir(h, *params[nb], reverse=True)
        h = jnp.concatenate([f, b], axis=-1)
    T, B, Hh = h.shape
    out = h.reshape(T * B, Hh) @ params["emb_w"].T + params["emb_b"]
    return out.reshape(T, B, -1)


if __name__ == "__main__":
    T, B, nIn, nHidden, nOut = 8, 2, 32, 32, 16
    key = jax.random.PRNGKey(0)
    kx, kp = jax.random.split(key)
    x = jax.random.normal(kx, (T, B, nIn), jnp.float32)
    params = init_params(kp, nIn, nHidden, nOut)

    out = jax.block_until_ready(bidirectional_lstm_forward(x, params))
    ref = jax.block_until_ready(reference_forward(x, params))
    # bf16 MXU operands / inter-layer activations => looser tolerance than an all-f32 run.
    np.testing.assert_allclose(np.asarray(out), np.asarray(ref), rtol=5e-2, atol=5e-2)
    assert out.shape == (T, B, nOut)
    print("KERNEL_OK")
</pallas_src>

<mosaic_0001>
module attributes {stable_mosaic.version = 11 : i64} {
  func.func @_proj_kernel(%arg0: i32, %arg1: memref<1x16x32xf32, #tpu.memory_space<vmem>>, %arg2: memref<2x1x32x512xbf16, #tpu.memory_space<vmem>>, %arg3: memref<2x1x512xf32, #tpu.memory_space<vmem>>, %arg4: memref<2x16x512xf32, #tpu.memory_space<vmem>>) attributes {dimension_semantics = [#tpu.dimension_semantics<parallel>], iteration_bounds = array<i64: 1>, scalar_prefetch = 0 : i64, scratch_operands = 0 : i64, tpu.core_type = #tpu.core_type<tc>, window_params = [{transform_indices = @transform_0, window_bounds = array<i64: 1, 16, 32>}, {pipeline_mode = #tpu.pipeline_mode<synchronous>, transform_indices = @transform_1, window_bounds = array<i64: 2, 1, 32, 512>}, {pipeline_mode = #tpu.pipeline_mode<synchronous>, transform_indices = @transform_2, window_bounds = array<i64: 2, 1, 512>}, {transform_indices = @transform_3, window_bounds = array<i64: 2, 16, 512>}]} {
    %c0 = arith.constant 0 : index
    %c0_0 = arith.constant 0 : index
    %c0_1 = arith.constant 0 : index
    %0 = vector.load %arg1[%c0, %c0_0, %c0_1] : memref<1x16x32xf32, #tpu.memory_space<vmem>>, vector<1x16x32xf32>
    %1 = vector.shape_cast %0 : vector<1x16x32xf32> to vector<16x32xf32>
    %2 = arith.truncf %1 : vector<16x32xf32> to vector<16x32xbf16>
    %c0_2 = arith.constant 0 : index
    %c0_3 = arith.constant 0 : index
    %c0_4 = arith.constant 0 : index
    %c0_5 = arith.constant 0 : index
    %3 = vector.load %arg2[%c0_2, %c0_3, %c0_4, %c0_5] : memref<2x1x32x512xbf16, #tpu.memory_space<vmem>>, vector<1x1x32x512xbf16>
    %4 = vector.shape_cast %3 : vector<1x1x32x512xbf16> to vector<32x512xbf16>
    %cst = arith.constant dense<0.000000e+00> : vector<16x512xf32>
    %5 = tpu.matmul %2, %4, %cst {dimension_numbers = #tpu.dot_dimension_numbers<[1], [0], [0], [1], [0, 0, 1, 1], [], []>} : vector<16x32xbf16>, vector<32x512xbf16>, vector<16x512xf32> -> vector<16x512xf32>
    %c0_6 = arith.constant 0 : index
    %c0_7 = arith.constant 0 : index
    %c0_8 = arith.constant 0 : index
    %6 = vector.load %arg3[%c0_6, %c0_7, %c0_8] : memref<2x1x512xf32, #tpu.memory_space<vmem>>, vector<1x1x512xf32>
    %7 = vector.shape_cast %6 : vector<1x1x512xf32> to vector<1x512xf32>
    %8 = vector.broadcast %7 : vector<1x512xf32> to vector<16x512xf32>
    %9 = arith.addf %5, %8 : vector<16x512xf32>
    %c0_9 = arith.constant 0 : index
    %c0_10 = arith.constant 0 : index
    %c0_11 = arith.constant 0 : index
    %10 = vector.load %arg4[%c0_9, %c0_10, %c0_11] : memref<2x16x512xf32, #tpu.memory_space<vmem>>, vector<1x16x512xf32>
    %11 = vector.shape_cast %10 : vector<1x16x512xf32> to vector<16x512xf32>
    %12 = vector.shape_cast %9 : vector<16x512xf32> to vector<1x16x512xf32>
    tpu.vector_store %arg4[%c0_9, %c0_10, %c0_11], %12 {strides = array<i32>} : memref<2x16x512xf32, #tpu.memory_space<vmem>>, vector<1x16x512xf32>,
    %c1 = arith.constant 1 : index
    %c0_12 = arith.constant 0 : index
    %c0_13 = arith.constant 0 : index
    %c0_14 = arith.constant 0 : index
    %13 = vector.load %arg2[%c1, %c0_12, %c0_13, %c0_14] : memref<2x1x32x512xbf16, #tpu.memory_space<vmem>>, vector<1x1x32x512xbf16>
    %14 = vector.shape_cast %13 : vector<1x1x32x512xbf16> to vector<32x512xbf16>
    %cst_15 = arith.constant dense<0.000000e+00> : vector<16x512xf32>
    %15 = tpu.matmul %2, %14, %cst_15 {dimension_numbers = #tpu.dot_dimension_numbers<[1], [0], [0], [1], [0, 0, 1, 1], [], []>} : vector<16x32xbf16>, vector<32x512xbf16>, vector<16x512xf32> -> vector<16x512xf32>
    %c1_16 = arith.constant 1 : index
    %c0_17 = arith.constant 0 : index
    %c0_18 = arith.constant 0 : index
    %16 = vector.load %arg3[%c1_16, %c0_17, %c0_18] : memref<2x1x512xf32, #tpu.memory_space<vmem>>, vector<1x1x512xf32>
    %17 = vector.shape_cast %16 : vector<1x1x512xf32> to vector<1x512xf32>
    %18 = vector.broadcast %17 : vector<1x512xf32> to vector<16x512xf32>
    %19 = arith.addf %15, %18 : vector<16x512xf32>
    %c1_19 = arith.constant 1 : index
    %c0_20 = arith.constant 0 : index
    %c0_21 = arith.constant 0 : index
    %20 = vector.load %arg4[%c1_19, %c0_20, %c0_21] : memref<2x16x512xf32, #tpu.memory_space<vmem>>, vector<1x16x512xf32>
    %21 = vector.shape_cast %20 : vector<1x16x512xf32> to vector<16x512xf32>
    %22 = vector.shape_cast %19 : vector<16x512xf32> to vector<1x16x512xf32>
    tpu.vector_store %arg4[%c1_19, %c0_20, %c0_21], %22 {strides = array<i32>} : memref<2x16x512xf32, #tpu.memory_space<vmem>>, vector<1x16x512xf32>,
    return
  }
  func.func @transform_0(%arg0: i32) -> (i32, i32, i32) {
    %c0_i32 = arith.constant 0 : i32
    %c0_i32_0 = arith.constant 0 : i32
    %c0_i32_1 = arith.constant 0 : i32
    return %c0_i32, %arg0, %c0_i32_0 : i32, i32, i32
  }
  func.func @transform_1(%arg0: i32) -> (i32, i32, i32, i32) {
    %c0_i32 = arith.constant 0 : i32
    %c0_i32_0 = arith.constant 0 : i32
    %c0_i32_1 = arith.constant 0 : i32
    %c0_i32_2 = arith.constant 0 : i32
    %c0_i32_3 = arith.constant 0 : i32
    return %c0_i32, %c0_i32_0, %c0_i32_1, %c0_i32_2 : i32, i32, i32, i32
  }
  func.func @transform_2(%arg0: i32) -> (i32, i32, i32) {
    %c0_i32 = arith.constant 0 : i32
    %c0_i32_0 = arith.constant 0 : i32
    %c0_i32_1 = arith.constant 0 : i32
    %c0_i32_2 = arith.constant 0 : i32
    return %c0_i32, %c0_i32_0, %c0_i32_1 : i32, i32, i32
  }
  func.func @transform_3(%arg0: i32) -> (i32, i32, i32) {
    %c0_i32 = arith.constant 0 : i32
    %c0_i32_0 = arith.constant 0 : i32
    %c0_i32_1 = arith.constant 0 : i32
    return %c0_i32, %arg0, %c0_i32_0 : i32, i32, i32
  }
}

</mosaic_0001>

<llo_original>
// kernel: tpu_custom_call.1
$region0: #{tpu_custom_call.1}
  #allocation0 [shape = 'u32[]', space=smem, size = 0x4, offset = 0x4, fixed_abs, tag = 'smem constant byte address 0x4 - core index']
  #allocation1 [shape = 'u32[144,128]{1,0:T(1,128)}', space=vmem, size = 0x12000, scoped, tag = 'internal scratch']
  %s0 = inlined_call_operand.hbm [shape: f32[1,16,32], index: 0, kind: input, shape index: {}]
  %s1 = inlined_call_operand.hbm [shape: bf16[2,1,32,512], index: 1, kind: input, shape index: {}]
  %s2 = inlined_call_operand.hbm [shape: f32[2,1,512], index: 2, kind: input, shape index: {}]
  %s3 = inlined_call_operand.hbm [shape: f32[2,16,512], index: 3, kind: output, shape index: {}]
  %s4 = sld [smem:[#allocation0]]
  $region34: #{tpu_custom_call.1} parent=0
    _
  %s6 = ssub.s32 1, %s4
  %s7 = scalar_select 0, %s6, %s4
  $region1: #{tpu_custom_call.1} parent=0
    #allocation2 [shape = 'u8[8192]{0}', space=vmem, size = 0x2000, scoped, tag = 'input window, operand 0, single buffered']
    #allocation3 [shape = 's32[1]{0}', space=sflag, size = 0x4, scoped, tag = 'scoped memory for tpu_custom_call.1']
    #allocation4 [shape = 's32[1]{0}', space=sflag, size = 0x4, scoped, tag = 'scoped memory for tpu_custom_call.1']
    #allocation5 [shape = 'u8[65536]{0}', space=vmem, size = 0x10000, scoped, tag = 'input window, operand 1, single buffered']
    #allocation6 [shape = 's32[1]{0}', space=sflag, size = 0x4, scoped, tag = 'scoped memory for tpu_custom_call.1']
    #allocation7 [shape = 'u8[4096]{0}', space=vmem, size = 0x1000, scoped, tag = 'input window, operand 2, single buffered']
    #allocation8 [shape = 'u8[65536]{0}', space=vmem, size = 0x10000, scoped, tag = 'output window, operand 0, single buffered']
    %8 = vsyncpa [#allocation3], 0
    %9 = vsyncpa [#allocation6], 0
    %10 = vsyncpa [#allocation4], 0
    // Predicated region
    $region2: #{tpu_custom_call.1} parent=1 // pred_check
      _
    $region3: #{tpu_custom_call.1} parent=1 // pred_check_branch
      %12 = sbr.rel (0) target = $region5
    $region4: #{tpu_custom_call.1} parent=1 // pred_region
      %s14 = ssub.s32 256, 256
      %15 = vsyncadd [#allocation3], %s14
      %s16 = sshll.u32 [#allocation2], 4
      %s17 = int_to_ptr.vmem [resolvable:$true] %s16
      %22 = dma.hbm_to_vmem [thread:$0]  %s0, 256, %s17, [#allocation3], 128, 128, 8
    $region5: #{tpu_custom_call.1} parent=1 // pred_fallthru
      _
    // Predicated region
    $region6: #{tpu_custom_call.1} parent=1 // pred_check
      _
    $region7: #{tpu_custom_call.1} parent=1 // pred_check_branch
      %24 = sbr.rel (0) target = $region9
    $region8: #{tpu_custom_call.1} parent=1 // pred_region
      %s26 = ssub.s32 2048, 2048
      %27 = vsyncadd [#allocation6], %s26
      %s28 = sshll.u32 [#allocation5], 4
      %s29 = int_to_ptr.vmem [resolvable:$true] %s28
      %34 = dma.hbm_to_vmem [thread:$0]  %s1, 2048, %s29, [#allocation6], 256, 256, 16
    $region9: #{tpu_custom_call.1} parent=1 // pred_fallthru
      _
    // Predicated region
    $region10: #{tpu_custom_call.1} parent=1 // pred_check
      _
    $region11: #{tpu_custom_call.1} parent=1 // pred_check_branch
      %36 = sbr.rel (0) target = $region13
    $region12: #{tpu_custom_call.1} parent=1 // pred_region
      %s38 = ssub.s32 128, 128
      %39 = vsyncadd [#allocation6], %s38
      %s40 = sshll.u32 [#allocation7], 4
      %s41 = int_to_ptr.vmem [resolvable:$true] %s40
      %46 = dma.hbm_to_vmem [thread:$0]  %s2, 128, %s41, [#allocation6], 64, 64, 4
    $region13: #{tpu_custom_call.1} parent=1 // pred_fallthru
      _
    // Predicated region
    $region14: #{tpu_custom_call.1} parent=1 // pred_check
      _
    $region15: #{tpu_custom_call.1} parent=1 // pred_check_branch
      %48 = sbr.rel (0) target = $region17
    $region16: #{tpu_custom_call.1} parent=1 // pred_region
      %49 = dma.done [#allocation3], 256
    $region17: #{tpu_custom_call.1} parent=1 // pred_fallthru
      _
    // Predicated region
    $region18: #{tpu_custom_call.1} parent=1 // pred_check
      _
    $region19: #{tpu_custom_call.1} parent=1 // pred_check_branch
      %51 = sbr.rel (0) target = $region21
    $region20: #{tpu_custom_call.1} parent=1 // pred_region
      %52 = dma.done [#allocation6], 2048
    $region21: #{tpu_custom_call.1} parent=1 // pred_fallthru
      _
    // Predicated region
    $region22: #{tpu_custom_call.1} parent=1 // pred_check
      _
    $region23: #{tpu_custom_call.1} parent=1 // pred_check_branch
      %54 = sbr.rel (0) target = $region25
    $region24: #{tpu_custom_call.1} parent=1 // pred_region
      %55 = dma.done [#allocation6], 128
    $region25: #{tpu_custom_call.1} parent=1 // pred_fallthru
      _
    %v57 = vld [vmem:[#allocation2] sm:$0xff]
    %v58 = vld [vmem:[#allocation2 + $0x8] sm:$0xff]
    %v59 = vpack.c.bf16 %v58, %v57
    %v60 = vld [vmem:[#allocation5] sm:$0xff]
    %v61 = vld [vmem:[#allocation5 + $0x8] sm:$0xff]
    %v62 = vld [vmem:[#allocation5 + $0x10] sm:$0xff]
    %v63 = vld [vmem:[#allocation5 + $0x18] sm:$0xff]
    %v64 = vld [vmem:[#allocation5 + $0x20] sm:$0xff]
    %v65 = vld [vmem:[#allocation5 + $0x28] sm:$0xff]
    %v66 = vld [vmem:[#allocation5 + $0x30] sm:$0xff]
    %v67 = vld [vmem:[#allocation5 + $0x38] sm:$0xff]
    %v68 = vld [vmem:[#allocation7] sm:$0xf]
    %v70 = vlaneseq
    %v71 = vshrl.u32 %v70, 7
    %v72 = vsub.s32 0, %v71
    %v73 = vrot.slane %v68, %v72
    %v74 = vlaneseq
    %v75 = vshrl.u32 %v74, 7
    %v76 = vsub.s32 1, %v75
    %v77 = vrot.slane %v68, %v76
    %v78 = vlaneseq
    %v79 = vshrl.u32 %v78, 7
    %v80 = vsub.s32 2, %v79
    %v81 = vrot.slane %v68, %v80
    %v82 = vlaneseq
    %v83 = vshrl.u32 %v82, 7
    %v84 = vsub.s32 3, %v83
    %v85 = vrot.slane %v68, %v84
    %v98 = vunpack.c.l.b16 %v60
    %v99 = vunpack.c.h.b16 %v60
    %v100 = vunpack.c.l.b16 %v61
    %v101 = vunpack.c.h.b16 %v61
    %v102 = vunpack.c.l.b16 %v62
    %v103 = vunpack.c.h.b16 %v62
    %v104 = vunpack.c.l.b16 %v63
    %v105 = vunpack.c.h.b16 %v63
    %v106 = vunpack.c.l.b16 %v64
    %v107 = vunpack.c.h.b16 %v64
    %v108 = vunpack.c.l.b16 %v65
    %v109 = vunpack.c.h.b16 %v65
    %v110 = vunpack.c.l.b16 %v66
    %v111 = vunpack.c.h.b16 %v66
    %v112 = vunpack.c.l.b16 %v67
    %v113 = vunpack.c.h.b16 %v67
    %v114 = vpack.c.b16 %v102, %v98
    %v115 = vpack.c.b16 %v103, %v99
    %v116 = vpack.c.b16 %v104, %v100
    %v117 = vpack.c.b16 %v105, %v101
    %v118 = vpack.c.b16 %v110, %v106
    %v119 = vpack.c.b16 %v111, %v107
    %v120 = vpack.c.b16 %v112, %v108
    %v121 = vpack.c.b16 %v113, %v109
    %vm130 = vcmask 261120
    %v132 = vsel %vm130, %v59, 0
    %134 = vmatprep.subr.bf16.mxu0 %v115
    %135 = vmatpush1.bf16.msra.mxu0 %v114
    %136 = vmatprep.subr.bf16.mxu0 %v119
    %137 = vmatpush1.bf16.msra.mxu0 %v118
    %138 = vmatprep.subr.bf16.mxu0 0
    %139 = vmatpush1.bf16.msra.mxu0 0
    %140 = vmatprep.subr.bf16.mxu0 0
    %141 = vmatpush1.bf16.msra.mxu0 0
    %142 = vmatprep.subr.bf16.mxu0 0
    %143 = vmatpush1.bf16.msra.mxu0 0
    %144 = vmatprep.subr.bf16.mxu0 0
    %145 = vmatpush1.bf16.msra.mxu0 0
    %146 = vmatprep.subr.bf16.mxu0 0
    %147 = vmatpush1.bf16.msra.mxu0 0
    %148 = vmatprep.subr.bf16.mxu0 0
    %149 = vmatpush1.bf16.msra.mxu0 0
    %150 = vmatprep.subr.bf16.mxu0 0
    %151 = vmatpush1.bf16.msra.mxu0 0
    %152 = vmatprep.subr.bf16.mxu0 0
    %153 = vmatpush1.bf16.msra.mxu0 0
    %154 = vmatprep.subr.bf16.mxu0 0
    %155 = vmatpush1.bf16.msra.mxu0 0
    %156 = vmatprep.subr.bf16.mxu0 0
    %157 = vmatpush1.bf16.msra.mxu0 0
    %158 = vmatprep.subr.bf16.mxu0 0
    %159 = vmatpush1.bf16.msra.mxu0 0
    %160 = vmatprep.subr.bf16.mxu0 0
    %161 = vmatpush1.bf16.msra.mxu0 0
    %162 = vmatprep.subr.bf16.mxu0 0
    %163 = vmatpush1.bf16.msra.mxu0 0
    %164 = vmatprep.subr.bf16.mxu0 0
    %165 = vmatpush1.bf16.msra.mxu0 0
    %166 = vmatprep.mubr.bf16.mxu0 0
    %167 = vmatmul.mubr.bf16.gmra.mrb[0].mxu0 %v132
    %v168 = vpop.f32.mrb[0].mxu0
    %v169 = vadd.f32 %v73, %v168
    %v170 = vpop.f32.mrb[0].mxu0
    %v171 = vadd.f32 %v77, %v170
    %v172 = vpop.f32.mrb[0].mxu0
    %v173 = vadd.f32 %v73, %v172
    %v174 = vpop.f32.mrb[0].mxu0
    %v175 = vadd.f32 %v77, %v174
    %176 = vdwg.mxu0
    %177 = vmatprep.subr.bf16.mxu0 %v117
    %178 = vmatpush1.bf16.msra.mxu0 %v116
    %179 = vmatprep.subr.bf16.mxu0 %v121
    %180 = vmatpush1.bf16.msra.mxu0 %v120
    %181 = vmatprep.subr.bf16.mxu0 0
    %182 = vmatpush1.bf16.msra.mxu0 0
    %183 = vmatprep.subr.bf16.mxu0 0
    %184 = vmatpush1.bf16.msra.mxu0 0
    %185 = vmatprep.subr.bf16.mxu0 0
    %186 = vmatpush1.bf16.msra.mxu0 0
    %187 = vmatprep.subr.bf16.mxu0 0
    %188 = vmatpush1.bf16.msra.mxu0 0
    %189 = vmatprep.subr.bf16.mxu0 0
    %190 = vmatpush1.bf16.msra.mxu0 0
    %191 = vmatprep.subr.bf16.mxu0 0
    %192 = vmatpush1.bf16.msra.mxu0 0
    %193 = vmatprep.subr.bf16.mxu0 0
    %194 = vmatpush1.bf16.msra.mxu0 0
    %195 = vmatprep.subr.bf16.mxu0 0
    %196 = vmatpush1.bf16.msra.mxu0 0
    %197 = vmatprep.subr.bf16.mxu0 0
    %198 = vmatpush1.bf16.msra.mxu0 0
    %199 = vmatprep.subr.bf16.mxu0 0
    %200 = vmatpush1.bf16.msra.mxu0 0
    %201 = vmatprep.subr.bf16.mxu0 0
    %202 = vmatpush1.bf16.msra.mxu0 0
    %203 = vmatprep.subr.bf16.mxu0 0
    %204 = vmatpush1.bf16.msra.mxu0 0
    %205 = vmatprep.subr.bf16.mxu0 0
    %206 = vmatpush1.bf16.msra.mxu0 0
    %207 = vmatprep.subr.bf16.mxu0 0
    %208 = vmatpush1.bf16.msra.mxu0 0
    %209 = vmatprep.mubr.bf16.mxu0 0
    %210 = vmatmul.mubr.bf16.gmra.mrb[0].mxu0 %v132
    %v211 = vpop.f32.mrb[0].mxu0
    %v212 = vadd.f32 %v81, %v211
    %v213 = vpop.f32.mrb[0].mxu0
    %v214 = vadd.f32 %v85, %v213
    %v215 = vpop.f32.mrb[0].mxu0
    %v216 = vadd.f32 %v81, %v215
    %v217 = vpop.f32.mrb[0].mxu0
    %v218 = vadd.f32 %v85, %v217
    %219 = vdwg.mxu0
    %220 = vst [vmem:[#allocation8] sm:$0xff] %v169
    %221 = vst [vmem:[#allocation8 + $0x8] sm:$0xff] %v171
    %222 = vst [vmem:[#allocation8 + $0x10] sm:$0xff] %v212
    %223 = vst [vmem:[#allocation8 + $0x18] sm:$0xff] %v214
    %224 = vst [vmem:[#allocation8 + $0x20] sm:$0xff] %v173
    %225 = vst [vmem:[#allocation8 + $0x28] sm:$0xff] %v175
    %226 = vst [vmem:[#allocation8 + $0x30] sm:$0xff] %v216
    %227 = vst [vmem:[#allocation8 + $0x38] sm:$0xff] %v218
    %s228 = scalar_lea.vmem [#allocation5], 64
    %v229 = vld [vmem:[%s228] sm:$0xff]
    %v230 = vld [vmem:[%s228 + $0x8] sm:$0xff]
    %v231 = vld [vmem:[%s228 + $0x10] sm:$0xff]
    %v232 = vld [vmem:[%s228 + $0x18] sm:$0xff]
    %v233 = vld [vmem:[%s228 + $0x20] sm:$0xff]
    %v234 = vld [vmem:[%s228 + $0x28] sm:$0xff]
    %v235 = vld [vmem:[%s228 + $0x30] sm:$0xff]
    %v236 = vld [vmem:[%s228 + $0x38] sm:$0xff]
    %s237 = scalar_lea.vmem [#allocation7], 4
    %v238 = vld [vmem:[%s237] sm:$0xf]
    %v240 = vlaneseq
    %v241 = vshrl.u32 %v240, 7
    %v242 = vsub.s32 0, %v241
    %v243 = vrot.slane %v238, %v242
    %v244 = vlaneseq
    %v245 = vshrl.u32 %v244, 7
    %v246 = vsub.s32 1, %v245
    %v247 = vrot.slane %v238, %v246
    %v248 = vlaneseq
    %v249 = vshrl.u32 %v248, 7
    %v250 = vsub.s32 2, %v249
    %v251 = vrot.slane %v238, %v250
    %v252 = vlaneseq
    %v253 = vshrl.u32 %v252, 7
    %v254 = vsub.s32 3, %v253
    %v255 = vrot.slane %v238, %v254
    %v268 = vunpack.c.l.b16 %v229
    %v269 = vunpack.c.h.b16 %v229
    %v270 = vunpack.c.l.b16 %v230
    %v271 = vunpack.c.h.b16 %v230
    %v272 = vunpack.c.l.b16 %v231
    %v273 = vunpack.c.h.b16 %v231
    %v274 = vunpack.c.l.b16 %v232
    %v275 = vunpack.c.h.b16 %v232
    %v276 = vunpack.c.l.b16 %v233
    %v277 = vunpack.c.h.b16 %v233
    %v278 = vunpack.c.l.b16 %v234
    %v279 = vunpack.c.h.b16 %v234
    %v280 = vunpack.c.l.b16 %v235
    %v281 = vunpack.c.h.b16 %v235
    %v282 = vunpack.c.l.b16 %v236
    %v283 = vunpack.c.h.b16 %v236
    %v284 = vpack.c.b16 %v272, %v268
    %v285 = vpack.c.b16 %v273, %v269
    %v286 = vpack.c.b16 %v274, %v270
    %v287 = vpack.c.b16 %v275, %v271
    %v288 = vpack.c.b16 %v280, %v276
    %v289 = vpack.c.b16 %v281, %v277
    %v290 = vpack.c.b16 %v282, %v278
    %v291 = vpack.c.b16 %v283, %v279
    %300 = vmatprep.subr.bf16.mxu0 %v285
    %301 = vmatpush1.bf16.msra.mxu0 %v284
    %302 = vmatprep.subr.bf16.mxu0 %v289
    %303 = vmatpush1.bf16.msra.mxu0 %v288
    %304 = vmatprep.subr.bf16.mxu0 0
    %305 = vmatpush1.bf16.msra.mxu0 0
    %306 = vmatprep.subr.bf16.mxu0 0
    %307 = vmatpush1.bf16.msra.mxu0 0
    %308 = vmatprep.subr.bf16.mxu0 0
    %309 = vmatpush1.bf16.msra.mxu0 0
    %310 = vmatprep.subr.bf16.mxu0 0
    %311 = vmatpush1.bf16.msra.mxu0 0
    %312 = vmatprep.subr.bf16.mxu0 0
    %313 = vmatpush1.bf16.msra.mxu0 0
    %314 = vmatprep.subr.bf16.mxu0 0
    %315 = vmatpush1.bf16.msra.mxu0 0
    %316 = vmatprep.subr.bf16.mxu0 0
    %317 = vmatpush1.bf16.msra.mxu0 0
    %318 = vmatprep.subr.bf16.mxu0 0
    %319 = vmatpush1.bf16.msra.mxu0 0
    %320 = vmatprep.subr.bf16.mxu0 0
    %321 = vmatpush1.bf16.msra.mxu0 0
    %322 = vmatprep.subr.bf16.mxu0 0
    %323 = vmatpush1.bf16.msra.mxu0 0
    %324 = vmatprep.subr.bf16.mxu0 0
    %325 = vmatpush1.bf16.msra.mxu0 0
    %326 = vmatprep.subr.bf16.mxu0 0
    %327 = vmatpush1.bf16.msra.mxu0 0
    %328 = vmatprep.subr.bf16.mxu0 0
    %329 = vmatpush1.bf16.msra.mxu0 0
    %330 = vmatprep.subr.bf16.mxu0 0
    %331 = vmatpush1.bf16.msra.mxu0 0
    %332 = vmatprep.mubr.bf16.mxu0 0
    %333 = vmatmul.mubr.bf16.gmra.mrb[0].mxu0 %v132
    %v334 = vpop.f32.mrb[0].mxu0
    %v335 = vadd.f32 %v243, %v334
    %v336 = vpop.f32.mrb[0].mxu0
    %v337 = vadd.f32 %v247, %v336
    %v338 = vpop.f32.mrb[0].mxu0
    %v339 = vadd.f32 %v243, %v338
    %v340 = vpop.f32.mrb[0].mxu0
    %v341 = vadd.f32 %v247, %v340
    %342 = vdwg.mxu0
    %343 = vmatprep.subr.bf16.mxu0 %v287
    %344 = vmatpush1.bf16.msra.mxu0 %v286
    %345 = vmatprep.subr.bf16.mxu0 %v291
    %346 = vmatpush1.bf16.msra.mxu0 %v290
    %347 = vmatprep.subr.bf16.mxu0 0
    %348 = vmatpush1.bf16.msra.mxu0 0
    %349 = vmatprep.subr.bf16.mxu0 0
    %350 = vmatpush1.bf16.msra.mxu0 0
    %351 = vmatprep.subr.bf16.mxu0 0
    %352 = vmatpush1.bf16.msra.mxu0 0
    %353 = vmatprep.subr.bf16.mxu0 0
    %354 = vmatpush1.bf16.msra.mxu0 0
    %355 = vmatprep.subr.bf16.mxu0 0
    %356 = vmatpush1.bf16.msra.mxu0 0
    %357 = vmatprep.subr.bf16.mxu0 0
    %358 = vmatpush1.bf16.msra.mxu0 0
    %359 = vmatprep.subr.bf16.mxu0 0
    %360 = vmatpush1.bf16.msra.mxu0 0
    %361 = vmatprep.subr.bf16.mxu0 0
    %362 = vmatpush1.bf16.msra.mxu0 0
    %363 = vmatprep.subr.bf16.mxu0 0
    %364 = vmatpush1.bf16.msra.mxu0 0
    %365 = vmatprep.subr.bf16.mxu0 0
    %366 = vmatpush1.bf16.msra.mxu0 0
    %367 = vmatprep.subr.bf16.mxu0 0
    %368 = vmatpush1.bf16.msra.mxu0 0
    %369 = vmatprep.subr.bf16.mxu0 0
    %370 = vmatpush1.bf16.msra.mxu0 0
    %371 = vmatprep.subr.bf16.mxu0 0
    %372 = vmatpush1.bf16.msra.mxu0 0
    %373 = vmatprep.subr.bf16.mxu0 0
    %374 = vmatpush1.bf16.msra.mxu0 0
    %375 = vmatprep.mubr.bf16.mxu0 0
    %376 = vmatmul.mubr.bf16.gmra.mrb[0].mxu0 %v132
    %v377 = vpop.f32.mrb[0].mxu0
    %v378 = vadd.f32 %v251, %v377
    %v379 = vpop.f32.mrb[0].mxu0
    %v380 = vadd.f32 %v255, %v379
    %v381 = vpop.f32.mrb[0].mxu0
    %v382 = vadd.f32 %v251, %v381
    %v383 = vpop.f32.mrb[0].mxu0
    %v384 = vadd.f32 %v255, %v383
    %385 = vdwg.mxu0
    %s386 = scalar_lea.vmem [#allocation8], 64
    %387 = vst [vmem:[%s386] sm:$0xff] %v335
    %388 = vst [vmem:[%s386 + $0x8] sm:$0xff] %v337
    %389 = vst [vmem:[%s386 + $0x10] sm:$0xff] %v378
    %390 = vst [vmem:[%s386 + $0x18] sm:$0xff] %v380
    %391 = vst [vmem:[%s386 + $0x20] sm:$0xff] %v339
    %392 = vst [vmem:[%s386 + $0x28] sm:$0xff] %v341
    %393 = vst [vmem:[%s386 + $0x30] sm:$0xff] %v382
    %394 = vst [vmem:[%s386 + $0x38] sm:$0xff] %v384
    // Predicated region
    $region26: #{tpu_custom_call.1} parent=1 // pred_check
      _
    $region27: #{tpu_custom_call.1} parent=1 // pred_check_branch
      %396 = sbr.rel (0) target = $region29
    $region28: #{tpu_custom_call.1} parent=1 // pred_region
      %s398 = ssub.s32 2048, 2048
      %399 = vsyncadd [#allocation4], %s398
      %s400 = sshll.u32 [#allocation8], 4
      %s401 = int_to_ptr.vmem [resolvable:$true] %s400
      %406 = dma.vmem_to_hbm [thread:$0]  %s401, 2048, %s3, [#allocation4], 512, 512, 32
    $region29: #{tpu_custom_call.1} parent=1 // pred_fallthru
      _
    // Predicated region
    $region30: #{tpu_custom_call.1} parent=1 // pred_check
      _
    $region31: #{tpu_custom_call.1} parent=1 // pred_check_branch
      %408 = sbr.rel (0) target = $region33
    $region32: #{tpu_custom_call.1} parent=1 // pred_region
      %409 = dma.done [#allocation4], 2048
    $region33: #{tpu_custom_call.1} parent=1 // pred_fallthru
      _
    %410 = vsyncpa [#allocation3], 1
    %411 = vsyncpa [#allocation6], 1
    %412 = vsyncpa [#allocation4], 1

</llo_original>
